<compile_context>
chip_gen: v5e
topology: v5e:2x2
jax: 0.10.0
libtpu: 0.0.40
codegen_flags: <defaults>
</compile_context>

<pallas_src>
import math

import jax
import jax.numpy as jnp
from jax.experimental import pallas as pl
from jax.experimental.pallas import tpu as pltpu


def _dma_copy_kernel(x_hbm, o_hbm, sem):
    # Single whole-array HBM->HBM DMA: the minimal materialization of the view.
    cp = pltpu.make_async_copy(x_hbm, o_hbm, sem)
    cp.start()
    cp.wait()


def _resolve_shape(batch, in_shape, target):
    """PyTorch `.view` shape resolution (supports at most one -1)."""
    total = math.prod(in_shape[1:])
    target = tuple(int(s) for s in target)
    n_infer = sum(1 for s in target if s == -1)
    if n_infer > 1:
        raise ValueError("only one dimension can be inferred (-1)")
    if n_infer == 1:
        known = math.prod(s for s in target if s != -1)
        if known == 0 or total % known != 0:
            raise ValueError(f"cannot infer -1: {total} not divisible by {known}")
        target = tuple(total // known if s == -1 else s for s in target)
    if math.prod(target) != total:
        raise ValueError("view shape is incompatible with input size")
    return (batch,) + target


def reshape_forward(x, *shape):
    """Pallas implementation of Reshape(*shape).forward(x)."""
    out_shape = _resolve_shape(x.shape[0], x.shape, shape)

    # The shape change happens here (XLA-level reshape of the input view); the
    # kernel then materializes the result with one DMA already in the *target*
    # shape, which for BlazePose-style targets (e.g. (N, 8, 128) or (N, -1)) is
    # lane/sublane dense with zero tile padding.
    # TODO(synk): if profiling shows this wrapper reshape lowers to a physical
    # relayout copy, fold the flattening into the kernel via index arithmetic.
    x_view = jnp.reshape(x, out_shape)

    return pl.pallas_call(
        _dma_copy_kernel,
        out_shape=jax.ShapeDtypeStruct(out_shape, x.dtype),
        in_specs=[pl.BlockSpec(memory_space=pl.ANY)],
        out_specs=pl.BlockSpec(memory_space=pl.ANY),
        scratch_shapes=[pltpu.SemaphoreType.DMA],
    )(x_view)


if __name__ == "__main__":
    key = jax.random.PRNGKey(0)

    # BlazePose-style input: (batch, C, H, W) = (2, 4, 16, 16)
    x = jax.random.normal(key, (2, 4, 16, 16), jnp.float32)

    # Reshape(8, 128): per-sample features re-viewed as (8, 128) — lane-dense.
    out = jax.block_until_ready(reshape_forward(x, 8, 128))
    ref = jnp.reshape(x, (2, 8, 128))
    assert out.shape == (2, 8, 128)
    assert jnp.array_equal(out, ref)

    # Reshape(-1): the flatten form also used in BlazePose.
    out_flat = jax.block_until_ready(reshape_forward(x, -1))
    assert out_flat.shape == (2, 1024)
    assert jnp.array_equal(out_flat, x.reshape(2, 1024))

    print("KERNEL_OK")
</pallas_src>

<mosaic_0001>
module attributes {stable_mosaic.version = 11 : i64} {
  func.func @_dma_copy_kernel(%arg0: memref<2x8x128xf32, #tpu.memory_space<any>>, %arg1: memref<2x8x128xf32, #tpu.memory_space<any>>, %arg2: memref<!tpu.dma_semaphore, #tpu.memory_space<semaphore_mem>>) attributes {dimension_semantics = [], scalar_prefetch = 0 : i64, scratch_operands = 1 : i64, tpu.core_type = #tpu.core_type<tc>} {
    tpu.enqueue_dma source(%arg0 : memref<2x8x128xf32, #tpu.memory_space<any>>) target(%arg1 : memref<2x8x128xf32, #tpu.memory_space<any>>) target_semaphore(%arg2 : memref<!tpu.dma_semaphore, #tpu.memory_space<semaphore_mem>>)
    tpu.wait_dma2 semaphore(%arg2 : memref<!tpu.dma_semaphore, #tpu.memory_space<semaphore_mem>>) src(%arg0 : memref<2x8x128xf32, #tpu.memory_space<any>>) dst(%arg1 : memref<2x8x128xf32, #tpu.memory_space<any>>)
    return
  }
}

</mosaic_0001>

<llo_original>
// kernel: tpu_custom_call.1
$region0: #{tpu_custom_call.1}
  #allocation0 [shape = 'u32[]', space=smem, size = 0x4, offset = 0x4, fixed_abs, tag = 'smem constant byte address 0x4 - core index']
  #allocation1 [shape = 'u32[72,128]{1,0:T(1,128)}', space=vmem, size = 0x9000, scoped, tag = 'internal scratch']
  #allocation2 [shape = 's32[1]{0}', space=sflag, size = 0x4, scoped, tag = 'scratch operand']
  #allocation3 [shape = 's32[]', space=sflag, size = 0x4, offset = 0, fixed_abs, tag = 'sflag constant byte address 0x0 - dummy sync flag']
  #allocation4 [shape = 'u32[0]{0}', space=smem, size = 0, offset = 0, fixed_abs, tag = 'smem constant byte address 0x0 - null']
  %s0 = inlined_call_operand.hbm [shape: f32[2,8,128], index: 0, kind: input, shape index: {}]
  %s1 = inlined_call_operand.hbm [shape: f32[2,8,128], index: 1, kind: output, shape index: {}]
  %s2 = sld [smem:[#allocation0]]
  $region2: #{tpu_custom_call.1} parent=0
    _
  %s4 = ssub.s32 1, %s2
  %s5 = scalar_select 0, %s4, %s2
  %s7 = sshll.u32 1, 14
  %s8 = sxor.u32 4294967295, %s7
  %s10 = sshll.u32 %s0, 4
  %s11 = int_to_ptr.hbm [resolvable:$true] %s10
  %s12 = sshll.u32 %s1, 4
  %s13 = int_to_ptr.hbm [resolvable:$true] %s12
  %16 = dma.general %s11, 256, %s13, [#allocation2], [#allocation3], [#allocation4], 0, 0
  %s17 = smul.u32 2, 8
  %s18 = smul.u32 %s17, 1
  %s19 = sshll.u32 %s18, 4
  %20 = dma.done [#allocation2], %s19
  %21 = vsyncmov [#allocation2]
  %s22 = vpop.sfrf %21
  %p23 = scmp.eq.s32.totalorder %s22, 0
  %p24 = pneg %p23
  %26 = shalt.err (%p24)

</llo_original>
